<compile_context>
chip_gen: v6e
topology: v6e:2x2x1
jax: 0.10.0
libtpu: 0.0.40
codegen_flags: <defaults>
</compile_context>

<pallas_src>
import functools

import jax
import jax.numpy as jnp
from jax.experimental import pallas as pl
from jax.experimental.pallas import tpu as pltpu


def _round_up(x, m):
    return ((x + m - 1) // m) * m


def attention_kernel(z_ref, w1b_ref, b1t_ref, w2b_ref, out_ref, beta_ref, *,
                     rt, mxu_dtype):
    """One grid block: tn rows of z laid out as (tn, M*D), processed rt rows at a time."""
    tn = z_ref.shape[0]
    mh = w1b_ref.shape[1]
    m = w2b_ref.shape[1]
    d = out_ref.shape[1]
    num_chunks = tn // rt
    approx_recip = jnp.dtype(mxu_dtype) != jnp.dtype(jnp.float32)

    # Constant operands: cast once, hoist the bias broadcast out of the chunk loop
    # (JAX does not CSE broadcast_in_dim inside loops).
    w1b = w1b_ref[...].astype(mxu_dtype)       # (M*D, M*H) block-diagonal Linear(D->H)
    w2b = w2b_ref[...].astype(mxu_dtype)       # (M*H, M)   block-diagonal Linear(H->1)
    b1 = jnp.broadcast_to(b1t_ref[...].astype(jnp.float32), (rt, mh))   # (rt, M*H)

    def chunk(c, carry):
        r0 = c * rt
        if not isinstance(r0, int):
            r0 = pl.multiple_of(r0, rt)

        # --- scoring MLP: the only two MXU matmuls (f32 accumulation) ---
        zc = z_ref[pl.ds(r0, rt), :].astype(mxu_dtype)                    # (rt, M*D)
        hid = jnp.tanh(
            jnp.dot(zc, w1b, preferred_element_type=jnp.float32) + b1)    # (rt, M*H)
        scores = jnp.dot(hid.astype(mxu_dtype), w2b,
                         preferred_element_type=jnp.float32)              # (rt, M)

        # --- softmax over the view axis (dim=1), numerically stable ---
        scores = scores - jnp.max(scores, axis=1, keepdims=True)
        ex = jnp.exp(scores)
        beta = ex * pl.reciprocal(jnp.sum(ex, axis=1, keepdims=True),
                                  approx=approx_recip)                    # (rt, M)

        # --- weighted sum over views: exact f32 on VPU/XLU, no MXU traffic ---
        # Re-read z here so its live range does not span the matmuls/softmax above
        # (keeps vreg pressure low; the VMEM block is already resident).
        z2 = z_ref[pl.ds(r0, rt), :].astype(jnp.float32)                  # (rt, M*D)
        acc = beta[:, 0:1] * z2[:, 0:d]
        for view in range(1, m):
            acc = acc + beta[:, view:view + 1] * z2[:, view * d:(view + 1) * d]

        out_ref[pl.ds(r0, rt), :] = acc.astype(out_ref.dtype)
        beta_ref[pl.ds(r0, rt), :] = beta.astype(beta_ref.dtype)
        return carry

    if num_chunks == 1:
        chunk(0, 0)
    else:
        jax.lax.fori_loop(0, num_chunks, chunk, 0, unroll=2)


def attention_forward(z, w1, b1, w2, *, chunk_rows=None, block_rows=None,
                      mxu_dtype=jnp.float32):
    """z: (N, M, D); w1: (D, H); b1: (H,) or (1, H); w2: (H, 1).

    Returns (out: (N, D) in z.dtype, beta: (N, M, 1) float32).
    mxu_dtype=jnp.bfloat16 runs the scoring matmuls with bf16 operands / f32
    accumulation (softmax and the weighted sum stay exact f32)."""
    N, M, D = z.shape
    Dw, H = w1.shape
    assert Dw == D
    mxu_dtype = jnp.dtype(mxu_dtype)
    w1 = jnp.asarray(w1).astype(jnp.float32)
    b1 = jnp.asarray(b1).reshape(1, H).astype(jnp.float32)
    w2 = jnp.asarray(w2).reshape(H, 1).astype(jnp.float32)
    MD, MH = M * D, M * H
    itemsize = jnp.dtype(z.dtype).itemsize
    lane = 128

    # ~64 KiB of z per in-kernel chunk (<= 16 f32 vregs live) to avoid spills.
    if chunk_rows is None:
        chunk_rows = max(8, (64 * 1024) // max(1, MD * itemsize))
    rt = min(chunk_rows, _round_up(N, 8))
    rt = max(8, (rt // 8) * 8)

    # Per-row VMEM cost of one buffer set (out/beta lane-pad to 128 in VMEM).
    bytes_per_row = (_round_up(MD, lane) * itemsize      # z block
                     + _round_up(D, lane) * itemsize     # out block
                     + _round_up(M, lane) * 4)           # beta block (f32)
    if block_rows is None:
        # ~36 MiB of double-buffered block VMEM: large blocks amortize the ~0.35us
        # per-grid-step overhead while fitting v7x's 64 MiB/TC with headroom.
        block_rows = max(rt, (36 << 20) // (2 * bytes_per_row))
    chunks_total = pl.cdiv(N, rt)
    min_steps = 4   # keep >= 2 grid steps per TensorCore on v7x megacore
    cpb = max(1, min(block_rows // rt, max(1, chunks_total // min_steps), chunks_total))
    tn = rt * cpb
    n_pad = _round_up(N, tn)

    z_flat = z.reshape(N, MD)
    if n_pad != N:
        z_flat = jnp.pad(z_flat, ((0, n_pad - N), (0, 0)))

    # Block-diagonal scoring weights (tiny; DMA'd once since their index_map is constant).
    eye_m = jnp.eye(M, dtype=jnp.float32)
    w1b = jnp.kron(eye_m, w1)       # (M*D, M*H)
    b1t = jnp.tile(b1, (1, M))      # (1, M*H)
    w2b = jnp.kron(eye_m, w2)       # (M*H, M)

    grid = (n_pad // tn,)

    weights_bytes = 2 * 4 * (_round_up(MD, 8) * _round_up(MH, lane)
                             + _round_up(MH, lane)
                             + _round_up(MH, 8) * _round_up(M, lane))
    vmem_limit = int(min(48 << 20,
                         max(32 << 20,
                             2 * tn * bytes_per_row + weights_bytes + (4 << 20))))

    kernel = functools.partial(attention_kernel, rt=rt, mxu_dtype=mxu_dtype)

    out2, beta2 = pl.pallas_call(
        kernel,
        out_shape=(
            jax.ShapeDtypeStruct((n_pad, D), z.dtype),
            jax.ShapeDtypeStruct((n_pad, M), jnp.float32),
        ),
        grid_spec=pltpu.PrefetchScalarGridSpec(
            num_scalar_prefetch=0,
            grid=grid,
            in_specs=[
                pl.BlockSpec((tn, MD), lambda i: (i, 0)),
                pl.BlockSpec((MD, MH), lambda i: (0, 0)),
                pl.BlockSpec((1, MH), lambda i: (0, 0)),
                pl.BlockSpec((MH, M), lambda i: (0, 0)),
            ],
            out_specs=[
                pl.BlockSpec((tn, D), lambda i: (i, 0)),
                pl.BlockSpec((tn, M), lambda i: (i, 0)),
            ],
        ),
        compiler_params=pltpu.CompilerParams(
            dimension_semantics=("parallel",),
            vmem_limit_bytes=vmem_limit,
        ),
    )(z_flat, w1b, b1t, w2b)

    out = out2[:N]
    beta = beta2[:N]
    return out, beta[..., None]


def attention_reference(z, w1, b1, w2):
    prec = jax.lax.Precision.HIGHEST
    w = jnp.tanh(jnp.einsum('nmd,dh->nmh', z, w1, precision=prec) + b1.reshape(1, 1, -1))
    s = jnp.einsum('nmh,ho->nmo', w, w2.reshape(-1, 1), precision=prec)
    beta = jax.nn.softmax(s, axis=1)
    return (beta * z).sum(axis=1), beta


def attention_reference_bf16(z, w1, b1, w2):
    # Mirrors the kernel's bf16 MXU-operand path (bf16-rounded matmul inputs,
    # f32 accumulation, f32 softmax and weighted sum).
    prec = jax.lax.Precision.HIGHEST
    bf = lambda a: a.astype(jnp.bfloat16).astype(jnp.float32)
    w = jnp.tanh(jnp.einsum('nmd,dh->nmh', bf(z), bf(w1), precision=prec)
                 + b1.reshape(1, 1, -1))
    s = jnp.einsum('nmh,ho->nmo', bf(w), bf(w2).reshape(-1, 1), precision=prec)
    beta = jax.nn.softmax(s, axis=1)
    return (beta * z).sum(axis=1), beta


if __name__ == "__main__":
    key = jax.random.PRNGKey(0)
    M, D, H = 4, 32, 8            # num views, in_size, hidden_size
    k1, k2, k3, k4 = jax.random.split(key, 4)
    w1 = jax.random.normal(k2, (D, H), dtype=jnp.float32) * (1.0 / D ** 0.5)
    b1 = jax.random.normal(k3, (1, H), dtype=jnp.float32) * 0.1
    w2 = jax.random.normal(k4, (H, 1), dtype=jnp.float32) * (1.0 / H ** 0.5)

    # 1) small batch, exact-f32 path (matches the PyTorch module numerics).
    N = 16
    z = jax.random.normal(k1, (N, M, D), dtype=jnp.float32)
    out, beta = attention_forward(z, w1, b1, w2)
    jax.block_until_ready((out, beta))
    ref_out, ref_beta = attention_reference(z, w1, b1, w2)
    assert out.shape == (N, D) and beta.shape == (N, M, 1)
    assert jnp.allclose(out, ref_out, atol=1e-4, rtol=1e-4), \
        float(jnp.max(jnp.abs(out - ref_out)))
    assert jnp.allclose(beta, ref_beta, atol=1e-4, rtol=1e-4), \
        float(jnp.max(jnp.abs(beta - ref_beta)))

    # 2) larger batch exercising the multi-chunk in-kernel loop, row padding and a
    #    multi-step parallel grid (still exact f32).
    N2 = 250
    zb = jax.random.normal(jax.random.PRNGKey(1), (N2, M, D), dtype=jnp.float32)
    out2, beta2 = attention_forward(zb, w1, b1, w2, chunk_rows=32, block_rows=128)
    jax.block_until_ready((out2, beta2))
    ref_out2, ref_beta2 = attention_reference(zb, w1, b1, w2)
    assert jnp.allclose(out2, ref_out2, atol=1e-4, rtol=1e-4), \
        float(jnp.max(jnp.abs(out2 - ref_out2)))
    assert jnp.allclose(beta2, ref_beta2, atol=1e-4, rtol=1e-4), \
        float(jnp.max(jnp.abs(beta2 - ref_beta2)))

    # 3) bf16 MXU-operand fast path (perf-review suggestion), checked against a
    #    reference with the same bf16 input rounding.
    out3, beta3 = attention_forward(zb, w1, b1, w2, mxu_dtype=jnp.bfloat16)
    jax.block_until_ready((out3, beta3))
    ref_out3, ref_beta3 = attention_reference_bf16(zb, w1, b1, w2)
    assert jnp.allclose(out3, ref_out3, atol=2e-2, rtol=2e-2), \
        float(jnp.max(jnp.abs(out3 - ref_out3)))
    assert jnp.allclose(beta3, ref_beta3, atol=2e-2, rtol=2e-2), \
        float(jnp.max(jnp.abs(beta3 - ref_beta3)))

    print("KERNEL_OK")
</pallas_src>

<mosaic_0001>
module attributes {stable_mosaic.version = 11 : i64} {
  func.func @attention_kernel(%arg0: i32, %arg1: memref<16x128xf32, #tpu.memory_space<vmem>>, %arg2: memref<128x32xf32, #tpu.memory_space<vmem>>, %arg3: memref<1x32xf32, #tpu.memory_space<vmem>>, %arg4: memref<32x4xf32, #tpu.memory_space<vmem>>, %arg5: memref<16x32xf32, #tpu.memory_space<vmem>>, %arg6: memref<16x4xf32, #tpu.memory_space<vmem>>) attributes {dimension_semantics = [#tpu.dimension_semantics<parallel>], iteration_bounds = array<i64: 1>, scalar_prefetch = 0 : i64, scratch_operands = 0 : i64, tpu.core_type = #tpu.core_type<tc>, window_params = [{transform_indices = @transform_0, window_bounds = array<i64: 16, 128>}, {pipeline_mode = #tpu.pipeline_mode<synchronous>, transform_indices = @transform_1, window_bounds = array<i64: 128, 32>}, {pipeline_mode = #tpu.pipeline_mode<synchronous>, transform_indices = @transform_2, window_bounds = array<i64: 1, 32>}, {pipeline_mode = #tpu.pipeline_mode<synchronous>, transform_indices = @transform_3, window_bounds = array<i64: 32, 4>}, {transform_indices = @transform_4, window_bounds = array<i64: 16, 32>}, {transform_indices = @transform_5, window_bounds = array<i64: 16, 4>}]} {
    %c0 = arith.constant 0 : index
    %c0_0 = arith.constant 0 : index
    %0 = vector.load %arg2[%c0, %c0_0] : memref<128x32xf32, #tpu.memory_space<vmem>>, vector<128x32xf32>
    %c0_1 = arith.constant 0 : index
    %c0_2 = arith.constant 0 : index
    %1 = vector.load %arg4[%c0_1, %c0_2] : memref<32x4xf32, #tpu.memory_space<vmem>>, vector<32x4xf32>
    %c0_3 = arith.constant 0 : index
    %c0_4 = arith.constant 0 : index
    %2 = vector.load %arg3[%c0_3, %c0_4] : memref<1x32xf32, #tpu.memory_space<vmem>>, vector<1x32xf32>
    %3 = vector.shape_cast %2 : vector<1x32xf32> to vector<1x32xf32>
    %4 = vector.broadcast %3 : vector<1x32xf32> to vector<16x32xf32>
    %c0_5 = arith.constant 0 : index
    %c0_6 = arith.constant 0 : index
    %5 = vector.load %arg1[%c0_5, %c0_6] : memref<16x128xf32, #tpu.memory_space<vmem>>, vector<16x128xf32>
    %cst = arith.constant dense<0.000000e+00> : vector<16x32xf32>
    %6 = tpu.matmul %5, %0, %cst {dimension_numbers = #tpu.dot_dimension_numbers<[1], [0], [0], [1], [0, 0, 1, 1], [], []>} : vector<16x128xf32>, vector<128x32xf32>, vector<16x32xf32> -> vector<16x32xf32>
    %7 = arith.addf %6, %4 : vector<16x32xf32>
    %8 = math.tanh %7 : vector<16x32xf32>
    %cst_7 = arith.constant dense<0.000000e+00> : vector<16x4xf32>
    %9 = tpu.matmul %8, %1, %cst_7 {dimension_numbers = #tpu.dot_dimension_numbers<[1], [0], [0], [1], [0, 0, 1, 1], [], []>} : vector<16x32xf32>, vector<32x4xf32>, vector<16x4xf32> -> vector<16x4xf32>
    %cst_8 = arith.constant dense<0xFF800000> : vector<16xf32>
    %10 = vector.multi_reduction <maximumf>, %9, %cst_8 [1] : vector<16x4xf32> to vector<16xf32>
    %11 = vector.shape_cast %10 : vector<16xf32> to vector<16x1xf32>
    %12 = vector.broadcast %11 : vector<16x1xf32> to vector<16x4xf32>
    %13 = arith.subf %9, %12 : vector<16x4xf32>
    %14 = math.exp %13 : vector<16x4xf32>
    %cst_9 = arith.constant dense<0.000000e+00> : vector<16xf32>
    %15 = vector.multi_reduction <add>, %14, %cst_9 [1] : vector<16x4xf32> to vector<16xf32>
    %16 = vector.shape_cast %15 : vector<16xf32> to vector<16x1xf32>
    %17 = tpu.reciprocal %16 : vector<16x1xf32> -> vector<16x1xf32>
    %18 = vector.broadcast %17 : vector<16x1xf32> to vector<16x4xf32>
    %19 = arith.mulf %14, %18 : vector<16x4xf32>
    %c0_10 = arith.constant 0 : index
    %c0_11 = arith.constant 0 : index
    %20 = vector.load %arg1[%c0_10, %c0_11] : memref<16x128xf32, #tpu.memory_space<vmem>>, vector<16x128xf32>
    %21 = vector.extract_strided_slice %19 {offsets = [0, 0], sizes = [16, 1], strides = [1, 1]} : vector<16x4xf32> to vector<16x1xf32>
    %22 = vector.extract_strided_slice %20 {offsets = [0, 0], sizes = [16, 32], strides = [1, 1]} : vector<16x128xf32> to vector<16x32xf32>
    %23 = vector.broadcast %21 : vector<16x1xf32> to vector<16x32xf32>
    %24 = arith.mulf %23, %22 : vector<16x32xf32>
    %25 = vector.extract_strided_slice %19 {offsets = [0, 1], sizes = [16, 1], strides = [1, 1]} : vector<16x4xf32> to vector<16x1xf32>
    %26 = vector.extract_strided_slice %20 {offsets = [0, 32], sizes = [16, 32], strides = [1, 1]} : vector<16x128xf32> to vector<16x32xf32>
    %27 = vector.broadcast %25 : vector<16x1xf32> to vector<16x32xf32>
    %28 = arith.mulf %27, %26 : vector<16x32xf32>
    %29 = arith.addf %24, %28 : vector<16x32xf32>
    %30 = vector.extract_strided_slice %19 {offsets = [0, 2], sizes = [16, 1], strides = [1, 1]} : vector<16x4xf32> to vector<16x1xf32>
    %31 = vector.extract_strided_slice %20 {offsets = [0, 64], sizes = [16, 32], strides = [1, 1]} : vector<16x128xf32> to vector<16x32xf32>
    %32 = vector.broadcast %30 : vector<16x1xf32> to vector<16x32xf32>
    %33 = arith.mulf %32, %31 : vector<16x32xf32>
    %34 = arith.addf %29, %33 : vector<16x32xf32>
    %35 = vector.extract_strided_slice %19 {offsets = [0, 3], sizes = [16, 1], strides = [1, 1]} : vector<16x4xf32> to vector<16x1xf32>
    %36 = vector.extract_strided_slice %20 {offsets = [0, 96], sizes = [16, 32], strides = [1, 1]} : vector<16x128xf32> to vector<16x32xf32>
    %37 = vector.broadcast %35 : vector<16x1xf32> to vector<16x32xf32>
    %38 = arith.mulf %37, %36 : vector<16x32xf32>
    %39 = arith.addf %34, %38 : vector<16x32xf32>
    %c0_12 = arith.constant 0 : index
    %c0_13 = arith.constant 0 : index
    %40 = vector.load %arg5[%c0_12, %c0_13] : memref<16x32xf32, #tpu.memory_space<vmem>>, vector<16x32xf32>
    tpu.vector_store %arg5[%c0_12, %c0_13], %39 {strides = array<i32>} : memref<16x32xf32, #tpu.memory_space<vmem>>, vector<16x32xf32>,
    %c0_14 = arith.constant 0 : index
    %c0_15 = arith.constant 0 : index
    %41 = vector.load %arg6[%c0_14, %c0_15] : memref<16x4xf32, #tpu.memory_space<vmem>>, vector<16x4xf32>
    tpu.vector_store %arg6[%c0_14, %c0_15], %19 {strides = array<i32>} : memref<16x4xf32, #tpu.memory_space<vmem>>, vector<16x4xf32>,
    return
  }
  func.func @transform_0(%arg0: i32) -> (i32, i32) {
    %c0_i32 = arith.constant 0 : i32
    %c0_i32_0 = arith.constant 0 : i32
    return %arg0, %c0_i32 : i32, i32
  }
  func.func @transform_1(%arg0: i32) -> (i32, i32) {
    %c0_i32 = arith.constant 0 : i32
    %c0_i32_0 = arith.constant 0 : i32
    %c0_i32_1 = arith.constant 0 : i32
    return %c0_i32, %c0_i32_0 : i32, i32
  }
  func.func @transform_2(%arg0: i32) -> (i32, i32) {
    %c0_i32 = arith.constant 0 : i32
    %c0_i32_0 = arith.constant 0 : i32
    %c0_i32_1 = arith.constant 0 : i32
    return %c0_i32, %c0_i32_0 : i32, i32
  }
  func.func @transform_3(%arg0: i32) -> (i32, i32) {
    %c0_i32 = arith.constant 0 : i32
    %c0_i32_0 = arith.constant 0 : i32
    %c0_i32_1 = arith.constant 0 : i32
    return %c0_i32, %c0_i32_0 : i32, i32
  }
  func.func @transform_4(%arg0: i32) -> (i32, i32) {
    %c0_i32 = arith.constant 0 : i32
    %c0_i32_0 = arith.constant 0 : i32
    return %arg0, %c0_i32 : i32, i32
  }
  func.func @transform_5(%arg0: i32) -> (i32, i32) {
    %c0_i32 = arith.constant 0 : i32
    %c0_i32_0 = arith.constant 0 : i32
    return %arg0, %c0_i32 : i32, i32
  }
}

</mosaic_0001>

<llo_original>
// kernel: tpu_custom_call.1
$region0: #{tpu_custom_call.1}
  #allocation0 [shape = 'u32[]', space=smem, size = 0x4, offset = 0x4, fixed_abs, tag = 'smem constant byte address 0x4 - core index']
  #allocation1 [shape = 'u32[144,128]{1,0:T(1,128)}', space=vmem, size = 0x12000, scoped, tag = 'internal scratch']
  %s0 = inlined_call_operand.vmem [shape: f32[16,128], index: 0, kind: input, shape index: {}]
  %s1 = inlined_call_operand.vmem [shape: f32[128,32], index: 1, kind: input, shape index: {}]
  %s2 = inlined_call_operand.vmem [shape: f32[1,32], index: 2, kind: input, shape index: {}]
  %s3 = inlined_call_operand.vmem [shape: f32[32,4], index: 3, kind: input, shape index: {}]
  %s4 = inlined_call_operand.hbm [shape: f32[16,32], index: 4, kind: output, shape index: {0}]
  %s5 = inlined_call_operand.vmem [shape: f32[16,4], index: 5, kind: output, shape index: {1}]
  %6 = xla_tuple %s4, %s5
  %s7 = sld [smem:[#allocation0]]
  $region34: #{tpu_custom_call.1} parent=0
    _
  %s9 = ssub.s32 1, %s7
  %s10 = scalar_select 0, %s9, %s7
  $region1: #{tpu_custom_call.1} parent=0
    #allocation2 [shape = 'u8[8192]{0}', space=vmem, size = 0x2000, scoped, tag = 'output window, operand 0, single buffered']
    #allocation3 [shape = 's32[1]{0}', space=sflag, size = 0x4, scoped, tag = 'scoped memory for tpu_custom_call.1']
    %11 = vsyncpa [#allocation3], 0
    // Predicated region
    $region2: #{tpu_custom_call.1} parent=1 // pred_check
      _
    $region3: #{tpu_custom_call.1} parent=1 // pred_check_branch
      %13 = sbr.rel (0) target = $region5
    $region4: #{tpu_custom_call.1} parent=1 // pred_region
      _
    $region5: #{tpu_custom_call.1} parent=1 // pred_fallthru
      _
    // Predicated region
    $region6: #{tpu_custom_call.1} parent=1 // pred_check
      _
    $region7: #{tpu_custom_call.1} parent=1 // pred_check_branch
      %15 = sbr.rel (0) target = $region9
    $region8: #{tpu_custom_call.1} parent=1 // pred_region
      _
    $region9: #{tpu_custom_call.1} parent=1 // pred_fallthru
      _
    // Predicated region
    $region10: #{tpu_custom_call.1} parent=1 // pred_check
      _
    $region11: #{tpu_custom_call.1} parent=1 // pred_check_branch
      %17 = sbr.rel (0) target = $region13
    $region12: #{tpu_custom_call.1} parent=1 // pred_region
      _
    $region13: #{tpu_custom_call.1} parent=1 // pred_fallthru
      _
    // Predicated region
    $region14: #{tpu_custom_call.1} parent=1 // pred_check
      _
    $region15: #{tpu_custom_call.1} parent=1 // pred_check_branch
      %19 = sbr.rel (0) target = $region17
    $region16: #{tpu_custom_call.1} parent=1 // pred_region
      _
    $region17: #{tpu_custom_call.1} parent=1 // pred_fallthru
      _
    %v20 = vld [vmem:[%s1] sm:$0xff]
    %v21 = vld [vmem:[%s1 + $0x8] sm:$0xff]
    %v22 = vld [vmem:[%s1 + $0x10] sm:$0xff]
    %v23 = vld [vmem:[%s1 + $0x18] sm:$0xff]
    %v24 = vld [vmem:[%s1 + $0x20] sm:$0xff]
    %v25 = vld [vmem:[%s1 + $0x28] sm:$0xff]
    %v26 = vld [vmem:[%s1 + $0x30] sm:$0xff]
    %v27 = vld [vmem:[%s1 + $0x38] sm:$0xff]
    %v28 = vld [vmem:[%s1 + $0x40] sm:$0xff]
    %v29 = vld [vmem:[%s1 + $0x48] sm:$0xff]
    %v30 = vld [vmem:[%s1 + $0x50] sm:$0xff]
    %v31 = vld [vmem:[%s1 + $0x58] sm:$0xff]
    %v32 = vld [vmem:[%s1 + $0x60] sm:$0xff]
    %v33 = vld [vmem:[%s1 + $0x68] sm:$0xff]
    %v34 = vld [vmem:[%s1 + $0x70] sm:$0xff]
    %v35 = vld [vmem:[%s1 + $0x78] sm:$0xff]
    %v36 = vld [vmem:[%s3] sm:$0xff]
    %v37 = vld [vmem:[%s3 + $0x8] sm:$0xff]
    %v38 = vld [vmem:[%s3 + $0x10] sm:$0xff]
    %v39 = vld [vmem:[%s3 + $0x18] sm:$0xff]
    %v40 = vld [vmem:[%s2] sm:$0x1]
    %v42 = vlaneseq
    %v43 = vshrl.u32 %v42, 7
    %v44 = vsub.s32 0, %v43
    %v45 = vrot.slane %v40, %v44
    %v47 = vld [vmem:[%s0] sm:$0xff]
    %v48 = vld [vmem:[%s0 + $0x8] sm:$0xff]
    %49 = vmatprep.subr.mxu0 0.0
    %50 = vmatpush1.msra.mxu0 %v35
    %51 = vmatprep.subr.mxu0 0.0
    %52 = vmatpush1.msra.mxu0 %v34
    %53 = vmatprep.subr.mxu0 0.0
    %54 = vmatpush1.msra.mxu0 %v33
    %55 = vmatprep.subr.mxu0 0.0
    %56 = vmatpush1.msra.mxu0 %v32
    %57 = vmatprep.subr.mxu0 0.0
    %58 = vmatpush1.msra.mxu0 %v31
    %59 = vmatprep.subr.mxu0 0.0
    %60 = vmatpush1.msra.mxu0 %v30
    %61 = vmatprep.subr.mxu0 0.0
    %62 = vmatpush1.msra.mxu0 %v29
    %63 = vmatprep.subr.mxu0 0.0
    %64 = vmatpush1.msra.mxu0 %v28
    %65 = vmatprep.subr.mxu0 0.0
    %66 = vmatpush1.msra.mxu0 %v27
    %67 = vmatprep.subr.mxu0 0.0
    %68 = vmatpush1.msra.mxu0 %v26
    %69 = vmatprep.subr.mxu0 0.0
    %70 = vmatpush1.msra.mxu0 %v25
    %71 = vmatprep.subr.mxu0 0.0
    %72 = vmatpush1.msra.mxu0 %v24
    %73 = vmatprep.subr.mxu0 0.0
    %74 = vmatpush1.msra.mxu0 %v23
    %75 = vmatprep.subr.mxu0 0.0
    %76 = vmatpush1.msra.mxu0 %v22
    %77 = vmatprep.subr.mxu0 0.0
    %78 = vmatpush1.msra.mxu0 %v21
    %79 = vmatprep.subr.mxu0 0.0
    %80 = vmatpush1.msra.mxu0 %v20
    %81 = vmatprep.subr.mxu0 0.0
    %82 = vmatpush2.msra.mxu0 0.0
    %83 = vmatprep.subr.mxu0 0.0
    %84 = vmatpush2.msra.mxu0 0.0
    %85 = vmatprep.subr.mxu0 0.0
    %86 = vmatpush2.msra.mxu0 0.0
    %87 = vmatprep.subr.mxu0 0.0
    %88 = vmatpush2.msra.mxu0 0.0
    %89 = vmatprep.subr.mxu0 0.0
    %90 = vmatpush2.msra.mxu0 0.0
    %91 = vmatprep.subr.mxu0 0.0
    %92 = vmatpush2.msra.mxu0 0.0
    %93 = vmatprep.subr.mxu0 0.0
    %94 = vmatpush2.msra.mxu0 0.0
    %95 = vmatprep.subr.mxu0 0.0
    %96 = vmatpush2.msra.mxu0 0.0
    %97 = vmatprep.subr.mxu0 0.0
    %98 = vmatpush2.msra.mxu0 0.0
    %99 = vmatprep.subr.mxu0 0.0
    %100 = vmatpush2.msra.mxu0 0.0
    %101 = vmatprep.subr.mxu0 0.0
    %102 = vmatpush2.msra.mxu0 0.0
    %103 = vmatprep.subr.mxu0 0.0
    %104 = vmatpush2.msra.mxu0 0.0
    %105 = vmatprep.subr.mxu0 0.0
    %106 = vmatpush2.msra.mxu0 0.0
    %107 = vmatprep.subr.mxu0 0.0
    %108 = vmatpush2.msra.mxu0 0.0
    %109 = vmatprep.subr.mxu0 0.0
    %110 = vmatpush2.msra.mxu0 0.0
    %111 = vmatprep.subr.mxu0 0.0
    %112 = vmatpush2.msra.mxu0 0.0
    %113 = vmatprep.mubr.f32.mxu0 0.0
    %114 = vmatmul.mubr.f32.gmra.mxu0 %v47
    %v115 = vpop.f32.mrf.mxu0
    %v116 = vadd.f32 %v45, %v115
    %v117 = vpop.f32.mrf.mxu0
    %118 = vmatprep.mubr.f32.mxu0 0.0
    %119 = vmatmul.mubr.f32.gmra.mxu0 %v48
    %v120 = vpop.f32.mrf.mxu0
    %v121 = vadd.f32 %v45, %v120
    %v122 = vpop.f32.mrf.mxu0
    %123 = vdwg.mxu0
    %v124 = vtanh.pop %v116
    %v125 = vtanh.pop %v121
    %vm126 = vcmask 261120
    %v128 = vsel %vm126, %v124, 0
    %v131 = vsel %vm126, %v125, 0
    %133 = vmatprep.subr.mxu0 0.0
    %134 = vmatpush1.msra.mxu0 0.0
    %135 = vmatprep.subr.mxu0 0.0
    %136 = vmatpush1.msra.mxu0 0.0
    %137 = vmatprep.subr.mxu0 0.0
    %138 = vmatpush1.msra.mxu0 0.0
    %139 = vmatprep.subr.mxu0 0.0
    %140 = vmatpush1.msra.mxu0 0.0
    %141 = vmatprep.subr.mxu0 0.0
    %142 = vmatpush1.msra.mxu0 0.0
    %143 = vmatprep.subr.mxu0 0.0
    %144 = vmatpush1.msra.mxu0 0.0
    %145 = vmatprep.subr.mxu0 0.0
    %146 = vmatpush1.msra.mxu0 0.0
    %147 = vmatprep.subr.mxu0 0.0
    %148 = vmatpush1.msra.mxu0 0.0
    %149 = vmatprep.subr.mxu0 0.0
    %150 = vmatpush1.msra.mxu0 0.0
    %151 = vmatprep.subr.mxu0 0.0
    %152 = vmatpush1.msra.mxu0 0.0
    %153 = vmatprep.subr.mxu0 0.0
    %154 = vmatpush1.msra.mxu0 0.0
    %155 = vmatprep.subr.mxu0 0.0
    %156 = vmatpush1.msra.mxu0 0.0
    %157 = vmatprep.subr.mxu0 0.0
    %158 = vmatpush1.msra.mxu0 %v39
    %159 = vmatprep.subr.mxu0 0.0
    %160 = vmatpush1.msra.mxu0 %v38
    %161 = vmatprep.subr.mxu0 0.0
    %162 = vmatpush1.msra.mxu0 %v37
    %163 = vmatprep.subr.mxu0 0.0
    %164 = vmatpush1.msra.mxu0 %v36
    %165 = vmatprep.subr.mxu0 0.0
    %166 = vmatpush2.msra.mxu0 0.0
    %167 = vmatprep.subr.mxu0 0.0
    %168 = vmatpush2.msra.mxu0 0.0
    %169 = vmatprep.subr.mxu0 0.0
    %170 = vmatpush2.msra.mxu0 0.0
    %171 = vmatprep.subr.mxu0 0.0
    %172 = vmatpush2.msra.mxu0 0.0
    %173 = vmatprep.subr.mxu0 0.0
    %174 = vmatpush2.msra.mxu0 0.0
    %175 = vmatprep.subr.mxu0 0.0
    %176 = vmatpush2.msra.mxu0 0.0
    %177 = vmatprep.subr.mxu0 0.0
    %178 = vmatpush2.msra.mxu0 0.0
    %179 = vmatprep.subr.mxu0 0.0
    %180 = vmatpush2.msra.mxu0 0.0
    %181 = vmatprep.subr.mxu0 0.0
    %182 = vmatpush2.msra.mxu0 0.0
    %183 = vmatprep.subr.mxu0 0.0
    %184 = vmatpush2.msra.mxu0 0.0
    %185 = vmatprep.subr.mxu0 0.0
    %186 = vmatpush2.msra.mxu0 0.0
    %187 = vmatprep.subr.mxu0 0.0
    %188 = vmatpush2.msra.mxu0 0.0
    %189 = vmatprep.subr.mxu0 0.0
    %190 = vmatpush2.msra.mxu0 0.0
    %191 = vmatprep.subr.mxu0 0.0
    %192 = vmatpush2.msra.mxu0 0.0
    %193 = vmatprep.subr.mxu0 0.0
    %194 = vmatpush2.msra.mxu0 0.0
    %195 = vmatprep.subr.mxu0 0.0
    %196 = vmatpush2.msra.mxu0 0.0
    %197 = vmatprep.mubr.f32.mxu0 0.0
    %198 = vmatmul.mubr.f32.gmra.mxu0 %v128
    %v199 = vpop.f32.mrf.mxu0
    %v200 = vadd.f32 0.0, %v199
    %v201 = vpop.f32.mrf.mxu0
    %202 = vmatprep.mubr.f32.mxu0 0.0
    %203 = vmatmul.mubr.f32.gmra.mxu0 %v131
    %v204 = vpop.f32.mrf.mxu0
    %v205 = vadd.f32 0.0, %v204
    %v206 = vpop.f32.mrf.mxu0
    %207 = vdwg.mxu0
    %vm208 = vcmask 31744
    %v209 = vsel %vm208, %v200, -inf
    %210 = vmax.xlane.f32.xlu0 %v209
    %v211 = vpop.xlane.xlu0 %210
    %v212 = vsel %vm208, %v205, -inf
    %213 = vmax.xlane.f32.xlu0 %v212
    %v214 = vpop.xlane.xlu0 %213
    %v215 = vsub.f32 %v200, %v211
    %v216 = vsub.f32 %v205, %v214
    %v217 = vmul.f32 %v215, 1.442695
    %v218 = vpow.pop %v217
    %v219 = vmul.f32 %v216, 1.442695
    %v220 = vpow.pop %v219
    %v221 = vsel %vm208, %v218, 0.0
    %222 = vadd.xlane.f32.xlu0 %v221
    %v223 = vpop.xlane.xlu0 %222
    %v224 = vsel %vm208, %v220, 0.0
    %225 = vadd.xlane.f32.xlu0 %v224
    %v226 = vpop.xlane.xlu0 %225
    %v227 = vrcp.pop %v223
    %v228 = vrcp.pop %v226
    %v229 = vmul.f32 %v218, %v227
    %v230 = vmul.f32 %v220, %v228
    %232 = vset.pattern.permute.xlu0 0
    %233 = vperm.xlu0 %232, %v229
    %v234 = vpop.permute.xlu0 %233
    %237 = vset.pattern.permute.xlu0 0
    %238 = vperm.xlu0 %237, %v230
    %v239 = vpop.permute.xlu0 %238
    %v241 = vmul.f32 %v234, %v47
    %v242 = vmul.f32 %v239, %v48
    %243 = vset.pattern.permute.xlu0 1
    %244 = vperm.xlu0 %243, %v229
    %v245 = vpop.permute.xlu0 %244
    %247 = vset.pattern.permute.xlu0 1
    %248 = vperm.xlu0 %247, %v230
    %v249 = vpop.permute.xlu0 %248
    %v251 = vmul.f32 %v245, %v47
    %v252 = vmul.f32 %v249, %v48
    %255 = vrot.lane.b32.xlu0 %v251, 96
    %v256 = vpop.permute.xlu0 %255
    %257 = vrot.lane.b32.xlu0 %v252, 96
    %v258 = vpop.permute.xlu0 %257
    %v261 = vadd.f32 %v241, %v256
    %v262 = vadd.f32 %v242, %v258
    %263 = vset.pattern.permute.xlu0 2
    %264 = vperm.xlu0 %263, %v229
    %v265 = vpop.permute.xlu0 %264
    %267 = vset.pattern.permute.xlu0 2
    %268 = vperm.xlu0 %267, %v230
    %v269 = vpop.permute.xlu0 %268
    %v271 = vmul.f32 %v265, %v47
    %v272 = vmul.f32 %v269, %v48
    %275 = vrot.lane.b32.xlu0 %v271, 64
    %v276 = vpop.permute.xlu0 %275
    %277 = vrot.lane.b32.xlu0 %v272, 64
    %v278 = vpop.permute.xlu0 %277
    %v281 = vadd.f32 %v261, %v276
    %v282 = vadd.f32 %v262, %v278
    %283 = vset.pattern.permute.xlu0 3
    %284 = vperm.xlu0 %283, %v229
    %v285 = vpop.permute.xlu0 %284
    %287 = vset.pattern.permute.xlu0 3
    %288 = vperm.xlu0 %287, %v230
    %v289 = vpop.permute.xlu0 %288
    %v291 = vmul.f32 %v285, %v47
    %v292 = vmul.f32 %v289, %v48
    %295 = vrot.lane.b32.xlu0 %v291, 32
    %v296 = vpop.permute.xlu0 %295
    %297 = vrot.lane.b32.xlu0 %v292, 32
    %v298 = vpop.permute.xlu0 %297
    %v301 = vadd.f32 %v281, %v296
    %v302 = vadd.f32 %v282, %v298
    %303 = vst.msk [vmem:[#allocation2] sm:$0xff] %vm126, %v301
    %304 = vst.msk [vmem:[#allocation2 + $0x8] sm:$0xff] %vm126, %v302
    %305 = vst.msk [vmem:[%s5] sm:$0xff] %vm208, %v229
    %306 = vst.msk [vmem:[%s5 + $0x8] sm:$0xff] %vm208, %v230
    // Predicated region
    $region18: #{tpu_custom_call.1} parent=1 // pred_check
      _
    $region19: #{tpu_custom_call.1} parent=1 // pred_check_branch
      %308 = sbr.rel (0) target = $region21
    $region20: #{tpu_custom_call.1} parent=1 // pred_region
      %s310 = ssub.s32 256, 256
      %311 = vsyncadd [#allocation3], %s310
      %s312 = sshll.u32 [#allocation2], 4
      %s313 = int_to_ptr.vmem [resolvable:$true] %s312
      %318 = dma.vmem_to_hbm [thread:$0]  %s313, 256, %s4, [#allocation3], 128, 128, 8
    $region21: #{tpu_custom_call.1} parent=1 // pred_fallthru
      _
    // Predicated region
    $region22: #{tpu_custom_call.1} parent=1 // pred_check
      _
    $region23: #{tpu_custom_call.1} parent=1 // pred_check_branch
      %320 = sbr.rel (0) target = $region25
    $region24: #{tpu_custom_call.1} parent=1 // pred_region
      _
    $region25: #{tpu_custom_call.1} parent=1 // pred_fallthru
      _
    // Predicated region
    $region26: #{tpu_custom_call.1} parent=1 // pred_check
      _
    $region27: #{tpu_custom_call.1} parent=1 // pred_check_branch
      %322 = sbr.rel (0) target = $region29
    $region28: #{tpu_custom_call.1} parent=1 // pred_region
      %323 = dma.done [#allocation3], 256
    $region29: #{tpu_custom_call.1} parent=1 // pred_fallthru
      _
    // Predicated region
    $region30: #{tpu_custom_call.1} parent=1 // pred_check
      _
    $region31: #{tpu_custom_call.1} parent=1 // pred_check_branch
      %325 = sbr.rel (0) target = $region33
    $region32: #{tpu_custom_call.1} parent=1 // pred_region
      _
    $region33: #{tpu_custom_call.1} parent=1 // pred_fallthru
      _
    %326 = vsyncpa [#allocation3], 1

</llo_original>
